<compile_context>
chip_gen: v7x
topology: tpu7x:2x2x1
jax: 0.10.0
libtpu: 0.0.40
codegen_flags: <defaults>
</compile_context>

<pallas_src>
import functools

import jax
import jax.numpy as jnp
from jax.experimental import pallas as pl
from jax.experimental.pallas import tpu as pltpu


def _coord_kernel(table_ref, out_ref, *, hw):
    """One grid step == one batch element.

    table_ref: (embed_num, embed_dim) embedding table, natural layout, VMEM.
    out_ref:   (embed_dim, hw) output block for the current batch index
               (batch dim squeezed via block_shape=None).

    The arange(hw) gather collapses to a static contiguous slice of the first
    hw rows; the channel-first permute is a 2-D transpose on the XLU, which is
    a free slot in this otherwise pure load/store kernel.
    """
    tab = table_ref[:hw, :]                       # (hw, embed_dim) static slice
    out_ref[...] = jnp.transpose(tab, (1, 0))     # (embed_dim, hw), XLU


def coord_layer_forward(x, embed_table):
    """x: (B, C, H, W) any float dtype. embed_table: (embed_num, embed_dim).

    Returns (B, embed_dim, H, W) in the embedding table's dtype, identical to
    CoordLayerNew.forward.
    """
    b, _, h, w = x.shape
    embed_num, embed_dim = embed_table.shape
    hw = h * w
    assert hw <= embed_num, "embedding table too small for H*W indices"

    out = pl.pallas_call(
        functools.partial(_coord_kernel, hw=hw),
        out_shape=jax.ShapeDtypeStruct((b, embed_dim, hw), embed_table.dtype),
        grid=(b,),
        in_specs=[
            # Whole table, same block every step (Pallas keeps it resident).
            pl.BlockSpec((embed_num, embed_dim), lambda i: (0, 0)),
        ],
        out_specs=pl.BlockSpec((None, embed_dim, hw), lambda i: (i, 0, 0)),
        compiler_params=pltpu.CompilerParams(
            dimension_semantics=("parallel",),
        ),
    )(embed_table)

    # Contiguous split of the trailing axis: bitcast reshape, no data movement.
    return out.reshape(b, embed_dim, h, w)


if __name__ == "__main__":
    # Module defaults: embed_num=196, embed_dim=10 -> H = W = 14 so that
    # H*W == 196 stays within the embedding table's index range.
    B, C, H, W = 2, 4, 14, 14
    EMBED_NUM, EMBED_DIM = 196, 10

    key = jax.random.PRNGKey(0)
    k_x, k_w = jax.random.split(key)

    x = jax.random.normal(k_x, (B, C, H, W), dtype=jnp.float32)
    # Deterministic synthetic embedding weights (nn.Embedding default ~ N(0,1)).
    embed_table = jax.random.normal(k_w, (EMBED_NUM, EMBED_DIM),
                                    dtype=jnp.float32)

    out = coord_layer_forward(x, embed_table)
    out = jax.block_until_ready(out)

    # Reference check in plain JAX (same semantics as the PyTorch module).
    idx = jnp.arange(H * W, dtype=jnp.int32)
    ref = jnp.take(embed_table, idx, axis=0)            # (H*W, D)
    ref = ref.reshape(H, W, EMBED_DIM)                  # (H, W, D)
    ref = jnp.transpose(ref, (2, 0, 1))                 # (D, H, W)
    ref = jnp.broadcast_to(ref[None], (B, EMBED_DIM, H, W))

    assert out.shape == (B, EMBED_DIM, H, W)
    assert out.dtype == jnp.float32
    assert jnp.allclose(out, ref, atol=1e-5, rtol=1e-5)

    print("KERNEL_OK")
</pallas_src>

<mosaic_0001>
module attributes {stable_mosaic.version = 11 : i64} {
  func.func @_coord_kernel(%arg0: i32, %arg1: memref<196x10xf32, #tpu.memory_space<vmem>>, %arg2: memref<1x10x196xf32, #tpu.memory_space<vmem>>) attributes {dimension_semantics = [#tpu.dimension_semantics<parallel>], iteration_bounds = array<i64: 2>, scalar_prefetch = 0 : i64, scratch_operands = 0 : i64, tpu.core_type = #tpu.core_type<tc>, window_params = [{pipeline_mode = #tpu.pipeline_mode<synchronous>, transform_indices = @transform_0, window_bounds = array<i64: 196, 10>}, {transform_indices = @transform_1, window_bounds = array<i64: 1, 10, 196>}]} {
    %c0 = arith.constant 0 : index
    %c0_0 = arith.constant 0 : index
    %0 = vector.load %arg1[%c0, %c0_0] : memref<196x10xf32, #tpu.memory_space<vmem>>, vector<196x10xf32>
    %1 = tpu.transpose %0, [1, 0] : vector<196x10xf32> -> vector<10x196xf32>
    %c0_1 = arith.constant 0 : index
    %c0_2 = arith.constant 0 : index
    %c0_3 = arith.constant 0 : index
    %2 = vector.load %arg2[%c0_1, %c0_2, %c0_3] : memref<1x10x196xf32, #tpu.memory_space<vmem>>, vector<1x10x196xf32>
    %3 = vector.shape_cast %2 : vector<1x10x196xf32> to vector<10x196xf32>
    %4 = vector.shape_cast %1 : vector<10x196xf32> to vector<1x10x196xf32>
    tpu.vector_store %arg2[%c0_1, %c0_2, %c0_3], %4 {strides = array<i32>} : memref<1x10x196xf32, #tpu.memory_space<vmem>>, vector<1x10x196xf32>,
    return
  }
  func.func @transform_0(%arg0: i32) -> (i32, i32) {
    %c0_i32 = arith.constant 0 : i32
    %c0_i32_0 = arith.constant 0 : i32
    %c0_i32_1 = arith.constant 0 : i32
    return %c0_i32, %c0_i32_0 : i32, i32
  }
  func.func @transform_1(%arg0: i32) -> (i32, i32, i32) {
    %c0_i32 = arith.constant 0 : i32
    %c0_i32_0 = arith.constant 0 : i32
    %c0_i32_1 = arith.constant 0 : i32
    return %arg0, %c0_i32, %c0_i32_0 : i32, i32, i32
  }
}

</mosaic_0001>

<llo_original>
// kernel: tpu_custom_call.1
$region0: #{tpu_custom_call.1}
  #allocation0 [shape = 'u32[]', space=smem, size = 0x4, offset = 0x4, fixed_abs, tag = 'smem constant byte address 0x4 - core index']
  #allocation1 [shape = 'u32[144,128]{1,0:T(1,128)}', space=vmem, size = 0x12000, scoped, tag = 'internal scratch']
  %s0 = inlined_call_operand.vmem [shape: f32[196,10], index: 0, kind: input, shape index: {}]
  %s1 = inlined_call_operand.vmem [shape: f32[2,10,196], index: 1, kind: output, shape index: {}]
  %s2 = sld [smem:[#allocation0]]
  $region37: #{tpu_custom_call.1} parent=0
    _
  %s4 = ssub.s32 1, %s2
  %s5 = scalar_select 0, %s4, %s2
  loop: start=0, step=1, limit=4
  $region2: #{tpu_custom_call.1} parent=0 // loop_pre_header
    _
  $region3: #{tpu_custom_call.1} parent=0 // loop_header
    %s7 = sphi 0, %s11
    %p8 = scmp.ge.s32.totalorder %s7, 4
    %s15 = sphi 0, %s15
    %s17 = sphi 0, %s15
    %s18 = sphi 0, %s17
    %s32 = sphi 0, %s18
    %s38 = sphi 0, %s40
    %s41 = sphi 0, %s38
    %s42 = sphi 0, %s41
    %s58 = sphi 0, %s42
  $region4: #{tpu_custom_call.1} parent=0 // loop_header_branch
    %10 = sbr.rel (%p8) target = $region8
  $region5: #{tpu_custom_call.1} parent=0 // loop_body
    %s12 = ssub.s32 %s7, 1
    %s13 = ssub.s32 %s7, 2
    %s14 = sadd.s32 %s7, 1
    %s16 = sadd.s32 %s15, 1
    %p19 = scmp.eq.s32.totalorder %s7, 1
    %p20 = scmp.ne.s32.totalorder %s15, %s17
    %p21 = scmp.eq.s32.totalorder %s7, 0
    %p22 = por %p20, %p21
    %p23 = scmp.ne.s32.totalorder %s15, %s17
    %p24 = scmp.eq.s32.totalorder %s12, 1
    %p25 = por %p23, %p24
    %p26 = scmp.ne.s32.totalorder %s17, %s18
    %p27 = scmp.eq.s32.totalorder %s12, 0
    %p28 = por %p26, %p27
    %p29 = scmp.ne.s32.totalorder %s17, %s18
    %p30 = scmp.eq.s32.totalorder %s13, 1
    %p31 = por %p29, %p30
    %p33 = scmp.ne.s32.totalorder %s18, %s32
    %p34 = scmp.eq.s32.totalorder %s13, 0
    %p35 = por %p33, %p34
    %s36 = ssub.s32 %s7, %s14
    %p37 = scmp.eq.s32.totalorder %s36, 0
    %s39 = sadd.s32 %s38, 1
    %s40 = scalar_select %p37, %s38, %s39
    %p43 = pneg %p37
    %p44 = scmp.eq.s32.totalorder %s7, 1
    %p45 = por %p43, %p44
    %p46 = scmp.ne.s32.totalorder %s38, %s41
    %p47 = scmp.eq.s32.totalorder %s7, 0
    %p48 = por %p46, %p47
    %p49 = scmp.ne.s32.totalorder %s38, %s41
    %p50 = scmp.eq.s32.totalorder %s12, 1
    %p51 = por %p49, %p50
    %p52 = scmp.ne.s32.totalorder %s41, %s42
    %p53 = scmp.eq.s32.totalorder %s12, 0
    %p54 = por %p52, %p53
    %p55 = scmp.ne.s32.totalorder %s41, %s42
    %p56 = scmp.eq.s32.totalorder %s13, 1
    %p57 = por %p55, %p56
    %p59 = scmp.ne.s32.totalorder %s42, %s58
    %p60 = scmp.eq.s32.totalorder %s13, 0
    %p61 = por %p59, %p60
    %p62 = scmp.le.s32.totalorder 1, %s7
    %p63 = scmp.lt.s32.totalorder %s7, 3
    %p64 = pnand %p62, %p63
    %p65 = pneg %p64
    // Predicated region
    $region9: #{tpu_custom_call.1} parent=5 // pred_check
      _
    $region10: #{tpu_custom_call.1} parent=5 // pred_check_branch
      %67 = sbr.rel (%p64) target = $region12
    $region11: #{tpu_custom_call.1} parent=5 // pred_region
      %s68 = ssub.s32 %s7, 1
      // Predicated region
      $region13: #{tpu_custom_call.1} parent=11 // pred_check
        %p69 = pneg %p28
      $region14: #{tpu_custom_call.1} parent=11 // pred_check_branch
        %71 = sbr.rel (%p69) target = $region16
      $region15: #{tpu_custom_call.1} parent=11 // pred_region
        _
      $region16: #{tpu_custom_call.1} parent=11 // pred_fallthru
        _
    $region12: #{tpu_custom_call.1} parent=5 // pred_fallthru
      _
    %p72 = scmp.lt.s32.totalorder %s7, 2
    // Predicated region
    $region17: #{tpu_custom_call.1} parent=5 // pred_check
      %p73 = pneg %p72
    $region18: #{tpu_custom_call.1} parent=5 // pred_check_branch
      %75 = sbr.rel (%p73) target = $region20
    $region19: #{tpu_custom_call.1} parent=5 // pred_region
      _
    $region20: #{tpu_custom_call.1} parent=5 // pred_fallthru
      _
    %p76 = scmp.le.s32.totalorder 1, %s7
    %p77 = scmp.lt.s32.totalorder %s7, 3
    %p78 = pnand %p76, %p77
    %p79 = pneg %p78
    // Predicated region
    $region21: #{tpu_custom_call.1} parent=5 // pred_check
      _
    $region22: #{tpu_custom_call.1} parent=5 // pred_check_branch
      %81 = sbr.rel (%p78) target = $region24
    $region23: #{tpu_custom_call.1} parent=5 // pred_region
      %s82 = ssub.s32 %s7, 1
      %p83 = pneg %p28
      %p84 = pneg %p25
      %p85 = pneg %p54
      %p86 = pneg %p51
      %p87 = scmp.lt.s32.totalorder %s12, 1
      %s88 = scalar_select %p87, %s12, 1
      %s89 = smul.addr %s88, 4
      %s90 = smul.addr %s89, 8
      %s91 = scalar_lea.vmem %s1, %s90
      %p92 = scmp.lt.s32.totalorder %s12, 1
      %s93 = scalar_select %p92, %s12, 1
      %s94 = smul.addr %s93, 4
      %s95 = smul.addr %s94, 8
      %s96 = scalar_lea.vmem %s1, %s95
      %v97 = vld [vmem:[%s0] sm:$0xff]
      %v98 = vld [vmem:[%s0 + $0x8] sm:$0xff]
      %v99 = vld [vmem:[%s0 + $0x10] sm:$0xff]
      %v100 = vld [vmem:[%s0 + $0x18] sm:$0xff]
      %v101 = vld [vmem:[%s0 + $0x20] sm:$0xff]
      %v102 = vld [vmem:[%s0 + $0x28] sm:$0xff]
      %v103 = vld [vmem:[%s0 + $0x30] sm:$0xff]
      %v104 = vld [vmem:[%s0 + $0x38] sm:$0xff]
      %v105 = vld [vmem:[%s0 + $0x40] sm:$0xff]
      %v106 = vld [vmem:[%s0 + $0x48] sm:$0xff]
      %v107 = vld [vmem:[%s0 + $0x50] sm:$0xff]
      %v108 = vld [vmem:[%s0 + $0x58] sm:$0xff]
      %v109 = vld [vmem:[%s0 + $0x60] sm:$0xff]
      %v110 = vld [vmem:[%s0 + $0x68] sm:$0xff]
      %v111 = vld [vmem:[%s0 + $0x70] sm:$0xff]
      %v112 = vld [vmem:[%s0 + $0x78] sm:$0xff]
      %v113 = vld [vmem:[%s0 + $0x80] sm:$0xff]
      %v114 = vld [vmem:[%s0 + $0x88] sm:$0xff]
      %v115 = vld [vmem:[%s0 + $0x90] sm:$0xff]
      %v116 = vld [vmem:[%s0 + $0x98] sm:$0xff]
      %v117 = vld [vmem:[%s0 + $0xa0] sm:$0xff]
      %v118 = vld [vmem:[%s0 + $0xa8] sm:$0xff]
      %v119 = vld [vmem:[%s0 + $0xb0] sm:$0xff]
      %v120 = vld [vmem:[%s0 + $0xb8] sm:$0xff]
      %v121 = vld [vmem:[%s0 + $0xc0] sm:$0xf]
      %122 = vxpose.xlu0.b32.start [1/16] %v97, 128
      %123 = vxpose.xlu0.b32.cont [2/16] %v98, 128
      %124 = vxpose.xlu0.b32.cont [3/16] %v99, 128
      %125 = vxpose.xlu0.b32.cont [4/16] %v100, 128
      %126 = vxpose.xlu0.b32.cont [5/16] %v101, 128
      %127 = vxpose.xlu0.b32.cont [6/16] %v102, 128
      %128 = vxpose.xlu0.b32.cont [7/16] %v103, 128
      %129 = vxpose.xlu0.b32.cont [8/16] %v104, 128
      %130 = vxpose.xlu0.b32.cont [9/16] %v105, 128
      %131 = vxpose.xlu0.b32.cont [10/16] %v106, 128
      %132 = vxpose.xlu0.b32.cont [11/16] %v107, 128
      %133 = vxpose.xlu0.b32.cont [12/16] %v108, 128
      %134 = vxpose.xlu0.b32.cont [13/16] %v109, 128
      %135 = vxpose.xlu0.b32.cont [14/16] %v110, 128
      %136 = vxpose.xlu0.b32.cont [15/16] %v111, 128
      %137 = vxpose.xlu0.b32.end [16/16] %v112, 128
      %v138 = vpop.trf.xlu0
      %v139 = vpop.trf.xlu0
      %v140 = vpop.trf.xlu0
      %v141 = vpop.trf.xlu0
      %v142 = vpop.trf.xlu0
      %v143 = vpop.trf.xlu0
      %v144 = vpop.trf.xlu0
      %v145 = vpop.trf.xlu0
      %v146 = vpop.trf.xlu0
      %v147 = vpop.trf.xlu0
      %v148 = vpop.trf.xlu0
      %v149 = vpop.trf.xlu0
      %v150 = vpop.trf.xlu0
      %v151 = vpop.trf.xlu0
      %v152 = vpop.trf.xlu0
      %v153 = vpop.trf.xlu0
      %154 = vxpose.xlu0.b32.start [1/16] %v113, 128
      %155 = vxpose.xlu0.b32.cont [2/16] %v114, 128
      %156 = vxpose.xlu0.b32.cont [3/16] %v115, 128
      %157 = vxpose.xlu0.b32.cont [4/16] %v116, 128
      %158 = vxpose.xlu0.b32.cont [5/16] %v117, 128
      %159 = vxpose.xlu0.b32.cont [6/16] %v118, 128
      %160 = vxpose.xlu0.b32.cont [7/16] %v119, 128
      %161 = vxpose.xlu0.b32.cont [8/16] %v120, 128
      %162 = vxpose.xlu0.b32.cont [9/16] %v121, 128
      %163 = vxpose.xlu0.b32.cont [10/16] 0.0, 128
      %164 = vxpose.xlu0.b32.cont [11/16] 0.0, 128
      %165 = vxpose.xlu0.b32.cont [12/16] 0.0, 128
      %166 = vxpose.xlu0.b32.cont [13/16] 0.0, 128
      %167 = vxpose.xlu0.b32.cont [14/16] 0.0, 128
      %168 = vxpose.xlu0.b32.cont [15/16] 0.0, 128
      %169 = vxpose.xlu0.b32.end [16/16] 0.0, 128
      %v170 = vpop.trf.xlu0
      %v171 = vpop.trf.xlu0
      %v172 = vpop.trf.xlu0
      %v173 = vpop.trf.xlu0
      %v174 = vpop.trf.xlu0
      %v175 = vpop.trf.xlu0
      %v176 = vpop.trf.xlu0
      %v177 = vpop.trf.xlu0
      %v178 = vpop.trf.xlu0
      %v179 = vpop.trf.xlu0
      %v180 = vpop.trf.xlu0
      %v181 = vpop.trf.xlu0
      %v182 = vpop.trf.xlu0
      %v183 = vpop.trf.xlu0
      %v184 = vpop.trf.xlu0
      %v185 = vpop.trf.xlu0
      %186 = vst [vmem:[%s96] sm:$0xff] %v138
      %vm187 = vcmask 556032
      %188 = vst.msk [vmem:[%s96 + $0x8] sm:$0xff] %vm187, %v170
      %189 = vst [vmem:[%s96 + $0x10] sm:$0x3] %v139
      %vm190 = vcmask 549888
      %191 = vst.msk [vmem:[%s96 + $0x18] sm:$0x3] %vm190, %v171
      %p192 = scmp.lt.s32.totalorder %s12, 1
      %s193 = scalar_select %p192, %s12, 1
      %s194 = smul.addr %s193, 4
      %s195 = smul.addr %s194, 8
      %s196 = scalar_lea.vmem %s1, %s195
      // Predicated region
      $region25: #{tpu_custom_call.1} parent=23 // pred_check
        %p197 = pneg %p51
      $region26: #{tpu_custom_call.1} parent=23 // pred_check_branch
        %199 = sbr.rel (%p197) target = $region28
      $region27: #{tpu_custom_call.1} parent=23 // pred_region
        _
      $region28: #{tpu_custom_call.1} parent=23 // pred_fallthru
        _
    $region24: #{tpu_custom_call.1} parent=5 // pred_fallthru
      _
    %p200 = scmp.le.s32.totalorder 2, %s7
    // Predicated region
    $region29: #{tpu_custom_call.1} parent=5 // pred_check
      %p201 = pneg %p200
    $region30: #{tpu_custom_call.1} parent=5 // pred_check_branch
      %203 = sbr.rel (%p201) target = $region32
    $region31: #{tpu_custom_call.1} parent=5 // pred_region
      %s204 = ssub.s32 %s7, 2
      // Predicated region
      $region33: #{tpu_custom_call.1} parent=31 // pred_check
        %p205 = pneg %p57
      $region34: #{tpu_custom_call.1} parent=31 // pred_check_branch
        %207 = sbr.rel (%p205) target = $region36
      $region35: #{tpu_custom_call.1} parent=31 // pred_region
        %p208 = scmp.lt.s32.totalorder %s13, 1
        %s209 = scalar_select %p208, %s13, 1
        %s210 = smul.addr %s209, 4
        %s211 = smul.addr %s210, 8
        %s212 = scalar_lea.vmem %s1, %s211
      $region36: #{tpu_custom_call.1} parent=31 // pred_fallthru
        _
    $region32: #{tpu_custom_call.1} parent=5 // pred_fallthru
      _
  $region6: #{tpu_custom_call.1} parent=0 // loop_footer
    %s11 = sadd.s32 1, %s7
  $region7: #{tpu_custom_call.1} parent=0 // loop_footer_branch
    %6 = sbr.rel target = $region3
  $region8: #{tpu_custom_call.1} parent=0 // loop_exit
    _

</llo_original>
